<compile_context>
chip_gen: v7x
topology: tpu7x:2x2x1
jax: 0.10.0
libtpu: 0.0.40
codegen_flags: <defaults>
</compile_context>

<pallas_src>
import jax
import jax.numpy as jnp
from jax.experimental import pallas as pl
from jax.experimental.pallas import tpu as pltpu

_LANES = 128
_SUBLANES = 8


def _normalization_kernel(x_ref, mean_ref, inv_std_ref, o_ref):
    # Pure elementwise VPU work in f32; (1, tile_f) vectors broadcast over rows.
    x = x_ref[...].astype(jnp.float32)          # (tile_b, tile_f)
    mu = mean_ref[...]                          # (1, tile_f) f32
    inv = inv_std_ref[...]                      # (1, tile_f) f32
    o_ref[...] = ((x - mu) * inv).astype(o_ref.dtype)


def _round_up(v, m):
    return ((v + m - 1) // m) * m


def _cdiv(a, b):
    return -(-a // b)


def _tpu_budgets():
    """Return (per-tile byte budget, scoped-VMEM limit) tuned per TPU generation."""
    vmem_cap = None
    try:
        info = pltpu.get_tpu_info()
        vmem_cap = getattr(info, "vmem_capacity_bytes", None)
    except Exception:
        vmem_cap = None
    if vmem_cap is not None and vmem_cap <= (64 << 20):
        # v7x-class: 64 MiB VMEM/TC -> ~3 MiB tiles, keep total <= ~48 MiB.
        return 3 << 20, 48 << 20
    # v5e / v6e: 128 MiB physical VMEM; only the scoped default limits us.
    return 6 << 20, 64 << 20


def normalization(x, mean, std, *, tile_b=None, tile_f=None):
    """y = (x - mean) / std with per-feature (F,) mean/std, via a Pallas kernel."""
    B, F = x.shape
    out_dtype = x.dtype

    mean_f32 = mean.astype(jnp.float32)
    inv_std_f32 = 1.0 / std.astype(jnp.float32)   # reciprocal once, in f32

    # --- narrow-F fast path: fold rows into 128 lanes (metadata-only reshape) ---
    reshaped = False
    if F < _LANES and _LANES % F == 0 and (B * F) % _LANES == 0:
        rep = _LANES // F
        x_work = x.reshape((B * F) // _LANES, _LANES)
        mean2d = jnp.tile(mean_f32, rep).reshape(1, _LANES)
        inv2d = jnp.tile(inv_std_f32, rep).reshape(1, _LANES)
        Bw, Fw = x_work.shape
        reshaped = True
    else:
        x_work = x
        mean2d = mean_f32.reshape(1, F)
        inv2d = inv_std_f32.reshape(1, F)
        Bw, Fw = B, F

    tile_budget, vmem_limit = _tpu_budgets()

    # --- feature tiling: full-F block unless it would blow the VMEM budget ------
    if tile_f is None:
        if Fw <= _LANES or _SUBLANES * 4 * Fw <= tile_budget:
            tile_f = Fw                                        # full-dim rule
        else:
            tile_f = max(_LANES, (tile_budget // (4 * _SUBLANES * _LANES)) * _LANES)
    else:
        tile_f = max(_LANES, (int(tile_f) // _LANES) * _LANES)
    if tile_f >= Fw:
        tile_f = Fw

    # --- row tiling: size purely from the byte budget (no 512-row cap) ----------
    if tile_b is None:
        rows = tile_budget // (4 * max(tile_f, 1))
        tile_b = max(_SUBLANES, (rows // _SUBLANES) * _SUBLANES)
    else:
        tile_b = max(_SUBLANES, _round_up(int(tile_b), _SUBLANES))

    if Bw <= _SUBLANES:
        tile_b = Bw                                            # full-dim rule
    else:
        tile_b = min(tile_b, _round_up(Bw, _SUBLANES))
        # >= 2 row steps (prefer an even count) so v7x's two TCs both get work.
        tile_b = min(tile_b, _round_up(_cdiv(Bw, 2), _SUBLANES))
        n_rows = _cdiv(Bw, tile_b)
        if n_rows > 1 and n_rows % 2 == 1:
            cand = _round_up(_cdiv(Bw, n_rows + 1), _SUBLANES)
            if cand >= _SUBLANES and _cdiv(Bw, cand) % 2 == 0:
                tile_b = cand

    grid = (_cdiv(Bw, tile_b), _cdiv(Fw, tile_f))

    itemsize = jnp.dtype(out_dtype).itemsize
    cost = pl.CostEstimate(
        flops=2 * B * F,
        transcendentals=0,
        bytes_accessed=2 * itemsize * B * F + 8 * F,
    )

    y_work = pl.pallas_call(
        _normalization_kernel,
        out_shape=jax.ShapeDtypeStruct((Bw, Fw), out_dtype),
        grid_spec=pltpu.PrefetchScalarGridSpec(
            num_scalar_prefetch=0,
            grid=grid,
            in_specs=[
                pl.BlockSpec((tile_b, tile_f), lambda i, j: (i, j)),   # x tile
                pl.BlockSpec((1, tile_f), lambda i, j: (0, j)),        # mean
                pl.BlockSpec((1, tile_f), lambda i, j: (0, j)),        # 1/std
            ],
            out_specs=pl.BlockSpec((tile_b, tile_f), lambda i, j: (i, j)),
        ),
        compiler_params=pltpu.CompilerParams(
            dimension_semantics=("parallel", "arbitrary"),
            vmem_limit_bytes=vmem_limit,
        ),
        cost_estimate=cost,
    )(x_work, mean2d, inv2d)

    if reshaped:
        y_work = y_work.reshape(B, F)
    return y_work


if __name__ == "__main__":
    key = jax.random.PRNGKey(0)
    kx1, kx2, kx3, kx4, km, ks = jax.random.split(key, 6)

    def ref(x, mean, std):
        return (x - mean[None, :]) / std[None, :]

    def make_stats(k_m, k_s, f):
        m = jax.random.normal(k_m, (f,), dtype=jnp.float32) * 0.1
        s = jnp.abs(jax.random.normal(k_s, (f,), dtype=jnp.float32)) + 0.5
        return m, s

    # Case 1: module-sized toy inputs (batch=8, n_features=32) -> narrow-F
    # reshape fast path ((8*32)/128 = 2 rows of 128 lanes).
    x1 = jax.random.normal(kx1, (8, 32), dtype=jnp.float32)
    m1, s1 = make_stats(km, ks, 32)
    y1 = jax.block_until_ready(normalization(x1, m1, s1))
    assert y1.shape == x1.shape and y1.dtype == x1.dtype
    assert jnp.allclose(y1, ref(x1, m1, s1), rtol=1e-5, atol=1e-6)

    # Case 2: ragged batch + non-128 feature dim (200x96), no HBM padding:
    # full-F blocks with masked final row tile. Explicit and default tiling.
    x2 = jax.random.normal(kx2, (200, 96), dtype=jnp.float32)
    m2, s2 = make_stats(km, ks, 96)
    y2a = jax.block_until_ready(normalization(x2, m2, s2, tile_b=64))
    y2b = jax.block_until_ready(normalization(x2, m2, s2))
    assert y2a.shape == x2.shape and y2a.dtype == x2.dtype
    assert jnp.allclose(y2a, ref(x2, m2, s2), rtol=1e-5, atol=1e-6)
    assert jnp.allclose(y2b, ref(x2, m2, s2), rtol=1e-5, atol=1e-6)

    # Case 3: narrow F where the reshape trick cannot apply (13*32 % 128 != 0):
    # falls back to full-F blocks with a masked ragged row block.
    x3 = jax.random.normal(kx3, (13, 32), dtype=jnp.float32)
    m3, s3 = make_stats(km, ks, 32)
    y3 = jax.block_until_ready(normalization(x3, m3, s3))
    assert y3.shape == x3.shape and y3.dtype == x3.dtype
    assert jnp.allclose(y3, ref(x3, m3, s3), rtol=1e-5, atol=1e-6)

    # Case 4: exercise the feature-axis grid split (tile_f=128 over F=256).
    x4 = jax.random.normal(kx4, (16, 256), dtype=jnp.float32)
    m4, s4 = make_stats(km, ks, 256)
    y4 = jax.block_until_ready(normalization(x4, m4, s4, tile_f=128))
    assert y4.shape == x4.shape and y4.dtype == x4.dtype
    assert jnp.allclose(y4, ref(x4, m4, s4), rtol=1e-5, atol=1e-6)

    print("KERNEL_OK")
</pallas_src>

<mosaic_0001>
module attributes {stable_mosaic.version = 11 : i64} {
  func.func @_normalization_kernel(%arg0: i32, %arg1: i32, %arg2: memref<2x128xf32, #tpu.memory_space<vmem>>, %arg3: memref<1x128xf32, #tpu.memory_space<vmem>>, %arg4: memref<1x128xf32, #tpu.memory_space<vmem>>, %arg5: memref<2x128xf32, #tpu.memory_space<vmem>>) attributes {dimension_semantics = [#tpu.dimension_semantics<parallel>, #tpu.dimension_semantics<arbitrary>], iteration_bounds = array<i64: 1, 1>, scalar_prefetch = 0 : i64, scratch_operands = 0 : i64, tpu.core_type = #tpu.core_type<tc>, window_params = [{transform_indices = @transform_0, window_bounds = array<i64: 2, 128>}, {transform_indices = @transform_1, window_bounds = array<i64: 1, 128>}, {transform_indices = @transform_2, window_bounds = array<i64: 1, 128>}, {transform_indices = @transform_3, window_bounds = array<i64: 2, 128>}]} {
    %c0 = arith.constant 0 : index
    %c0_0 = arith.constant 0 : index
    %0 = vector.load %arg2[%c0, %c0_0] : memref<2x128xf32, #tpu.memory_space<vmem>>, vector<2x128xf32>
    %c0_1 = arith.constant 0 : index
    %c0_2 = arith.constant 0 : index
    %1 = vector.load %arg3[%c0_1, %c0_2] : memref<1x128xf32, #tpu.memory_space<vmem>>, vector<1x128xf32>
    %c0_3 = arith.constant 0 : index
    %c0_4 = arith.constant 0 : index
    %2 = vector.load %arg4[%c0_3, %c0_4] : memref<1x128xf32, #tpu.memory_space<vmem>>, vector<1x128xf32>
    %3 = vector.broadcast %1 : vector<1x128xf32> to vector<2x128xf32>
    %4 = arith.subf %0, %3 : vector<2x128xf32>
    %5 = vector.broadcast %2 : vector<1x128xf32> to vector<2x128xf32>
    %6 = arith.mulf %4, %5 : vector<2x128xf32>
    %c0_5 = arith.constant 0 : index
    %c0_6 = arith.constant 0 : index
    %7 = vector.load %arg5[%c0_5, %c0_6] : memref<2x128xf32, #tpu.memory_space<vmem>>, vector<2x128xf32>
    tpu.vector_store %arg5[%c0_5, %c0_6], %6 {strides = array<i32>} : memref<2x128xf32, #tpu.memory_space<vmem>>, vector<2x128xf32>,
    return
  }
  func.func @transform_0(%arg0: i32, %arg1: i32) -> (i32, i32) {
    %c0_i32 = arith.constant 0 : i32
    return %arg0, %arg1 : i32, i32
  }
  func.func @transform_1(%arg0: i32, %arg1: i32) -> (i32, i32) {
    %c0_i32 = arith.constant 0 : i32
    %c0_i32_0 = arith.constant 0 : i32
    return %c0_i32, %arg1 : i32, i32
  }
  func.func @transform_2(%arg0: i32, %arg1: i32) -> (i32, i32) {
    %c0_i32 = arith.constant 0 : i32
    %c0_i32_0 = arith.constant 0 : i32
    return %c0_i32, %arg1 : i32, i32
  }
  func.func @transform_3(%arg0: i32, %arg1: i32) -> (i32, i32) {
    %c0_i32 = arith.constant 0 : i32
    return %arg0, %arg1 : i32, i32
  }
}

</mosaic_0001>

<llo_original>
// kernel: tpu_custom_call.1
$region0: #{tpu_custom_call.1}
  #allocation0 [shape = 'u32[]', space=smem, size = 0x4, offset = 0x4, fixed_abs, tag = 'smem constant byte address 0x4 - core index']
  #allocation1 [shape = 'u32[144,128]{1,0:T(1,128)}', space=vmem, size = 0x12000, scoped, tag = 'internal scratch']
  %s0 = inlined_call_operand.hbm [shape: f32[2,128], index: 0, kind: input, shape index: {}]
  %s1 = inlined_call_operand.hbm [shape: f32[1,128], index: 1, kind: input, shape index: {}]
  %s2 = inlined_call_operand.hbm [shape: f32[1,128], index: 2, kind: input, shape index: {}]
  %s3 = inlined_call_operand.hbm [shape: f32[2,128], index: 3, kind: output, shape index: {}]
  %s4 = sld [smem:[#allocation0]]
  $region34: #{tpu_custom_call.1} parent=0
    _
  %s6 = ssub.s32 1, %s4
  %s7 = scalar_select 0, %s6, %s4
  $region1: #{tpu_custom_call.1} parent=0
    #allocation2 [shape = 'u8[1024]{0}', space=vmem, size = 0x400, scoped, tag = 'input window, operand 0, single buffered']
    #allocation3 [shape = 's32[1]{0}', space=sflag, size = 0x4, scoped, tag = 'scoped memory for tpu_custom_call.1']
    #allocation4 [shape = 's32[1]{0}', space=sflag, size = 0x4, scoped, tag = 'scoped memory for tpu_custom_call.1']
    #allocation5 [shape = 'u8[512]{0}', space=vmem, size = 0x400, scoped, tag = 'input window, operand 1, single buffered']
    #allocation6 [shape = 's32[1]{0}', space=sflag, size = 0x4, scoped, tag = 'scoped memory for tpu_custom_call.1']
    #allocation7 [shape = 'u8[512]{0}', space=vmem, size = 0x400, scoped, tag = 'input window, operand 2, single buffered']
    #allocation8 [shape = 'u8[1024]{0}', space=vmem, size = 0x400, scoped, tag = 'output window, operand 0, single buffered']
    %8 = vsyncpa [#allocation3], 0
    %9 = vsyncpa [#allocation6], 0
    %10 = vsyncpa [#allocation4], 0
    // Predicated region
    $region2: #{tpu_custom_call.1} parent=1 // pred_check
      _
    $region3: #{tpu_custom_call.1} parent=1 // pred_check_branch
      %12 = sbr.rel (0) target = $region5
    $region4: #{tpu_custom_call.1} parent=1 // pred_region
      %s14 = ssub.s32 32, 32
      %15 = vsyncadd [#allocation3], %s14
      %s17 = sshll.u32 [#allocation2], 4
      %s18 = int_to_ptr.vmem [resolvable:$true] %s17
      %20 = dma.hbm_to_vmem [thread:$0]  %s0, 32, %s18, [#allocation3]
    $region5: #{tpu_custom_call.1} parent=1 // pred_fallthru
      _
    // Predicated region
    $region6: #{tpu_custom_call.1} parent=1 // pred_check
      _
    $region7: #{tpu_custom_call.1} parent=1 // pred_check_branch
      %22 = sbr.rel (0) target = $region9
    $region8: #{tpu_custom_call.1} parent=1 // pred_region
      %s24 = ssub.s32 16, 16
      %25 = vsyncadd [#allocation6], %s24
      %s27 = sshll.u32 [#allocation5], 4
      %s28 = int_to_ptr.vmem [resolvable:$true] %s27
      %30 = dma.hbm_to_vmem [thread:$0]  %s1, 16, %s28, [#allocation6]
    $region9: #{tpu_custom_call.1} parent=1 // pred_fallthru
      _
    // Predicated region
    $region10: #{tpu_custom_call.1} parent=1 // pred_check
      _
    $region11: #{tpu_custom_call.1} parent=1 // pred_check_branch
      %32 = sbr.rel (0) target = $region13
    $region12: #{tpu_custom_call.1} parent=1 // pred_region
      %s34 = ssub.s32 16, 16
      %35 = vsyncadd [#allocation6], %s34
      %s37 = sshll.u32 [#allocation7], 4
      %s38 = int_to_ptr.vmem [resolvable:$true] %s37
      %40 = dma.hbm_to_vmem [thread:$0]  %s2, 16, %s38, [#allocation6]
    $region13: #{tpu_custom_call.1} parent=1 // pred_fallthru
      _
    // Predicated region
    $region14: #{tpu_custom_call.1} parent=1 // pred_check
      _
    $region15: #{tpu_custom_call.1} parent=1 // pred_check_branch
      %42 = sbr.rel (0) target = $region17
    $region16: #{tpu_custom_call.1} parent=1 // pred_region
      %43 = dma.done [#allocation3], 32
    $region17: #{tpu_custom_call.1} parent=1 // pred_fallthru
      _
    // Predicated region
    $region18: #{tpu_custom_call.1} parent=1 // pred_check
      _
    $region19: #{tpu_custom_call.1} parent=1 // pred_check_branch
      %45 = sbr.rel (0) target = $region21
    $region20: #{tpu_custom_call.1} parent=1 // pred_region
      %46 = dma.done [#allocation6], 16
    $region21: #{tpu_custom_call.1} parent=1 // pred_fallthru
      _
    // Predicated region
    $region22: #{tpu_custom_call.1} parent=1 // pred_check
      _
    $region23: #{tpu_custom_call.1} parent=1 // pred_check_branch
      %48 = sbr.rel (0) target = $region25
    $region24: #{tpu_custom_call.1} parent=1 // pred_region
      %49 = dma.done [#allocation6], 16
    $region25: #{tpu_custom_call.1} parent=1 // pred_fallthru
      _
    %v50 = vld [vmem:[#allocation2] sm:$0x3]
    %v51 = vld [vmem:[#allocation5] sm:$0x1]
    %v52 = vld [vmem:[#allocation7] sm:$0x1]
    %v54 = vlaneseq
    %v55 = vshrl.u32 %v54, 7
    %v56 = vsub.s32 0, %v55
    %v57 = vrot.slane %v51, %v56
    %v59 = vsub.f32 %v50, %v57
    %v61 = vlaneseq
    %v62 = vshrl.u32 %v61, 7
    %v63 = vsub.s32 0, %v62
    %v64 = vrot.slane %v52, %v63
    %v66 = vmul.f32 %v59, %v64
    %67 = vst [vmem:[#allocation8] sm:$0x3] %v66
    // Predicated region
    $region26: #{tpu_custom_call.1} parent=1 // pred_check
      _
    $region27: #{tpu_custom_call.1} parent=1 // pred_check_branch
      %69 = sbr.rel (0) target = $region29
    $region28: #{tpu_custom_call.1} parent=1 // pred_region
      %s71 = ssub.s32 32, 32
      %72 = vsyncadd [#allocation4], %s71
      %s74 = sshll.u32 [#allocation8], 4
      %s75 = int_to_ptr.vmem [resolvable:$true] %s74
      %77 = dma.vmem_to_hbm [thread:$0]  %s75, 32, %s3, [#allocation4]
    $region29: #{tpu_custom_call.1} parent=1 // pred_fallthru
      _
    // Predicated region
    $region30: #{tpu_custom_call.1} parent=1 // pred_check
      _
    $region31: #{tpu_custom_call.1} parent=1 // pred_check_branch
      %79 = sbr.rel (0) target = $region33
    $region32: #{tpu_custom_call.1} parent=1 // pred_region
      %80 = dma.done [#allocation4], 32
    $region33: #{tpu_custom_call.1} parent=1 // pred_fallthru
      _
    %81 = vsyncpa [#allocation3], 1
    %82 = vsyncpa [#allocation6], 1
    %83 = vsyncpa [#allocation4], 1

</llo_original>
